<compile_context>
chip_gen: v5e
topology: v5e:2x2
jax: 0.10.0
libtpu: 0.0.40
codegen_flags: <defaults>
</compile_context>

<pallas_src>
import functools

import jax
import jax.numpy as jnp
from jax.experimental import pallas as pl
from jax.experimental.pallas import tpu as pltpu

_LANES = 128
_TARGET_BLOCK_BYTES = 4 << 20      # ~4 MiB blocks: roofline plateau incl. v7x
_VMEM_LIMIT_BYTES = 32 << 20       # explicit so the 16 MiB pipelined footprint fits v5e too
_SMALL_FALLBACK_ELEMS = 64 * 1024  # below this, kernel dispatch overhead dominates


def _clip_kernel(x_ref, o_ref, *, min_val, max_val):
    o_ref[...] = jnp.clip(x_ref[...], min_val, max_val)


def _clip_2d(x2d, min_c, max_c):
    """Clip a lane-dense (rows, 128) slab with a row-tiled Pallas pipeline."""
    rows, lanes = x2d.shape
    dtype = x2d.dtype
    itemsize = jnp.dtype(dtype).itemsize
    # Sub-32-bit dtypes pack along sublanes: 8 (f32), 16 (bf16), 32 (int8).
    sublane_pack = max(8, 32 // itemsize)

    # dtype-dependent row tile targeting ~4 MiB per block, clamped to the
    # (sublane-rounded) array size so small inputs get a snug single block.
    row_tile = _TARGET_BLOCK_BYTES // (lanes * itemsize)
    rows_rounded = ((rows + sublane_pack - 1) // sublane_pack) * sublane_pack
    row_tile = min(row_tile, rows_rounded)
    row_tile = max((row_tile // sublane_pack) * sublane_pack, sublane_pack)

    grid = (pl.cdiv(rows, row_tile),)
    n_bytes = rows * lanes * itemsize

    kernel = functools.partial(_clip_kernel, min_val=min_c, max_val=max_c)

    return pl.pallas_call(
        kernel,
        out_shape=jax.ShapeDtypeStruct((rows, lanes), dtype),
        grid=grid,
        in_specs=[pl.BlockSpec((row_tile, lanes), lambda i: (i, 0))],
        out_specs=pl.BlockSpec((row_tile, lanes), lambda i: (i, 0)),
        input_output_aliases={0: 0},
        cost_estimate=pl.CostEstimate(
            flops=rows * lanes, transcendentals=0, bytes_accessed=2 * n_bytes
        ),
        compiler_params=pltpu.CompilerParams(
            dimension_semantics=("parallel",),
            vmem_limit_bytes=_VMEM_LIMIT_BYTES,
        ),
    )(x2d)


def clip_pallas(x, min_val, max_val):
    """Elementwise clamp of `x` (any shape) between min_val and max_val."""
    n = x.size
    if n == 0:
        return x

    # Bake clamp bounds as dtype-matched compile-time constants.
    np_dtype = jnp.dtype(x.dtype)
    min_c = np_dtype.type(min_val)
    max_c = np_dtype.type(max_val)

    # Tiny tensors: XLA's fused clip is already at roofline; skip kernel dispatch.
    if n < _SMALL_FALLBACK_ELEMS:
        return jnp.clip(x, min_c, max_c)

    x_flat = jnp.ravel(x)  # layout-free reshape
    n_main = (n // _LANES) * _LANES

    if n_main == n:
        # Common path: no padding, no extra HBM passes.
        out_flat = _clip_2d(
            x_flat.reshape(n // _LANES, _LANES), min_c, max_c
        ).reshape(-1)
    else:
        # Rare ragged path: kernel over the 128-aligned prefix, clip the
        # <=127-element tail with plain jnp and stitch (no full-array pad/slice).
        main = _clip_2d(
            x_flat[:n_main].reshape(n_main // _LANES, _LANES), min_c, max_c
        ).reshape(-1)
        tail = jnp.clip(x_flat[n_main:], min_c, max_c)
        out_flat = jnp.concatenate([main, tail])

    return out_flat.reshape(x.shape)


class ClipPallas:
    """Mirror of the PyTorch Clip module, calling the Pallas kernel."""

    def __init__(self, min, max):
        self.min = min
        self.max = max

    def __call__(self, x):
        return clip_pallas(x, self.min, self.max)


if __name__ == "__main__":
    key = jax.random.PRNGKey(0)
    k1, k2, k3 = jax.random.split(key, 3)

    clip_min, clip_max = -1.0, 1.0
    mod = ClipPallas(clip_min, clip_max)

    # 1) Small NCHW input consistent with the module (batch=2, ch=4, 16x16).
    #    This exercises the small-input fallback path.
    x_small = jax.random.normal(k1, (2, 4, 16, 16), dtype=jnp.float32) * 3.0
    ref_small = jnp.clip(x_small, clip_min, clip_max)
    out_small = jax.block_until_ready(mod(x_small))
    assert out_small.shape == x_small.shape and out_small.dtype == x_small.dtype
    assert jnp.allclose(out_small, ref_small), "mismatch (small path)"

    # 2) Larger NCHW input that exercises the Pallas kernel (128-aligned path).
    x_big = jax.random.normal(k2, (4, 8, 64, 64), dtype=jnp.float32) * 3.0
    ref_big = jnp.clip(x_big, clip_min, clip_max)
    out_big = jax.block_until_ready(mod(x_big))
    assert out_big.shape == x_big.shape and out_big.dtype == x_big.dtype
    assert jnp.allclose(out_big, ref_big), "mismatch (kernel path)"

    # 3) Ragged size (n % 128 != 0): kernel on prefix + stitched tail.
    x_rag = jax.random.normal(k3, (131072 + 37,), dtype=jnp.float32) * 3.0
    ref_rag = jnp.clip(x_rag, clip_min, clip_max)
    out_rag = jax.block_until_ready(mod(x_rag))
    assert out_rag.shape == x_rag.shape and out_rag.dtype == x_rag.dtype
    assert jnp.allclose(out_rag, ref_rag), "mismatch (ragged path)"

    print("KERNEL_OK")
</pallas_src>

<mosaic_0001>
module attributes {stable_mosaic.version = 11 : i64} {
  func.func @_clip_kernel(%arg0: i32, %arg1: memref<1024x128xf32, #tpu.memory_space<vmem>>, %arg2: memref<1024x128xf32, #tpu.memory_space<vmem>>) attributes {dimension_semantics = [#tpu.dimension_semantics<parallel>], iteration_bounds = array<i64: 1>, scalar_prefetch = 0 : i64, scratch_operands = 0 : i64, tpu.core_type = #tpu.core_type<tc>, window_params = [{transform_indices = @transform_0, window_bounds = array<i64: 1024, 128>}, {transform_indices = @transform_1, window_bounds = array<i64: 1024, 128>}]} {
    %c0 = arith.constant 0 : index
    %c0_0 = arith.constant 0 : index
    %0 = vector.load %arg1[%c0, %c0_0] : memref<1024x128xf32, #tpu.memory_space<vmem>>, vector<1024x128xf32>
    %cst = arith.constant -1.000000e+00 : f32
    %cst_1 = arith.constant 1.000000e+00 : f32
    %1 = vector.broadcast %cst : f32 to vector<1024x128xf32>
    %2 = arith.maximumf %1, %0 : vector<1024x128xf32>
    %3 = vector.broadcast %cst_1 : f32 to vector<1024x128xf32>
    %4 = arith.minimumf %3, %2 : vector<1024x128xf32>
    %c0_2 = arith.constant 0 : index
    %c0_3 = arith.constant 0 : index
    %5 = vector.load %arg2[%c0_2, %c0_3] : memref<1024x128xf32, #tpu.memory_space<vmem>>, vector<1024x128xf32>
    tpu.vector_store %arg2[%c0_2, %c0_3], %4 {strides = array<i32>} : memref<1024x128xf32, #tpu.memory_space<vmem>>, vector<1024x128xf32>,
    return
  }
  func.func @transform_0(%arg0: i32) -> (i32, i32) {
    %c0_i32 = arith.constant 0 : i32
    %c0_i32_0 = arith.constant 0 : i32
    return %arg0, %c0_i32 : i32, i32
  }
  func.func @transform_1(%arg0: i32) -> (i32, i32) {
    %c0_i32 = arith.constant 0 : i32
    %c0_i32_0 = arith.constant 0 : i32
    return %arg0, %c0_i32 : i32, i32
  }
}

</mosaic_0001>

<llo_original>
// kernel: tpu_custom_call.1
$region0: #{tpu_custom_call.1}
  #allocation0 [shape = 'u32[]', space=smem, size = 0x4, offset = 0x4, fixed_abs, tag = 'smem constant byte address 0x4 - core index']
  #allocation1 [shape = 'u32[72,128]{1,0:T(1,128)}', space=vmem, size = 0x9000, scoped, tag = 'internal scratch']
  %s0 = inlined_call_operand.hbm [shape: f32[1024,128], index: 0, kind: input, shape index: {}, may-alias: {0,1}]
  %s1 = inlined_call_operand.hbm [shape: f32[1024,128], index: 1, kind: output, shape index: {}, may-alias: {0,1}]
  %s2 = sld [smem:[#allocation0]]
  $region18: #{tpu_custom_call.1} parent=0
    _
  %s4 = ssub.s32 1, %s2
  %s5 = scalar_select 0, %s4, %s2
  $region1: #{tpu_custom_call.1} parent=0
    #allocation2 [shape = 'u8[524288]{0}', space=vmem, size = 0x80000, scoped, tag = 'input window, operand 0, single buffered']
    #allocation3 [shape = 's32[1]{0}', space=sflag, size = 0x4, scoped, tag = 'scoped memory for tpu_custom_call.1']
    #allocation4 [shape = 's32[1]{0}', space=sflag, size = 0x4, scoped, tag = 'scoped memory for tpu_custom_call.1']
    #allocation5 [shape = 'u8[524288]{0}', space=vmem, size = 0x80000, scoped, tag = 'output window, operand 0, single buffered']
    %6 = vsyncpa [#allocation3], 0
    %7 = vsyncpa [#allocation4], 0
    // Predicated region
    $region2: #{tpu_custom_call.1} parent=1 // pred_check
      _
    $region3: #{tpu_custom_call.1} parent=1 // pred_check_branch
      %9 = sbr.rel (0) target = $region5
    $region4: #{tpu_custom_call.1} parent=1 // pred_region
      %11 = vsyncadd [#allocation3], 0
      %s12 = sshll.u32 %s0, 4
      %s13 = int_to_ptr.hbm [resolvable:$true] %s12
      %s14 = sshll.u32 [#allocation2], 4
      %s15 = int_to_ptr.vmem [resolvable:$true] %s14
      %20 = dma.hbm_to_vmem [thread:$0]  %s13, 16384, %s15, [#allocation3], 128, 128, 8
    $region5: #{tpu_custom_call.1} parent=1 // pred_fallthru
      _
    // Predicated region
    $region6: #{tpu_custom_call.1} parent=1 // pred_check
      _
    $region7: #{tpu_custom_call.1} parent=1 // pred_check_branch
      %22 = sbr.rel (0) target = $region9
    $region8: #{tpu_custom_call.1} parent=1 // pred_region
      %24 = dma.done [#allocation3], 16384
    $region9: #{tpu_custom_call.1} parent=1 // pred_fallthru
      _
    %v25 = vld [vmem:[#allocation2] sm:$0xff]
    %v26 = vld [vmem:[#allocation2 + $0x8] sm:$0xff]
    %v27 = vld [vmem:[#allocation2 + $0x10] sm:$0xff]
    %v28 = vld [vmem:[#allocation2 + $0x18] sm:$0xff]
    %v29 = vld [vmem:[#allocation2 + $0x20] sm:$0xff]
    %v30 = vld [vmem:[#allocation2 + $0x28] sm:$0xff]
    %v31 = vld [vmem:[#allocation2 + $0x30] sm:$0xff]
    %v32 = vld [vmem:[#allocation2 + $0x38] sm:$0xff]
    %v33 = vld [vmem:[#allocation2 + $0x40] sm:$0xff]
    %v34 = vld [vmem:[#allocation2 + $0x48] sm:$0xff]
    %v35 = vld [vmem:[#allocation2 + $0x50] sm:$0xff]
    %v36 = vld [vmem:[#allocation2 + $0x58] sm:$0xff]
    %v37 = vld [vmem:[#allocation2 + $0x60] sm:$0xff]
    %v38 = vld [vmem:[#allocation2 + $0x68] sm:$0xff]
    %v39 = vld [vmem:[#allocation2 + $0x70] sm:$0xff]
    %v40 = vld [vmem:[#allocation2 + $0x78] sm:$0xff]
    %v41 = vld [vmem:[#allocation2 + $0x80] sm:$0xff]
    %v42 = vld [vmem:[#allocation2 + $0x88] sm:$0xff]
    %v43 = vld [vmem:[#allocation2 + $0x90] sm:$0xff]
    %v44 = vld [vmem:[#allocation2 + $0x98] sm:$0xff]
    %v45 = vld [vmem:[#allocation2 + $0xa0] sm:$0xff]
    %v46 = vld [vmem:[#allocation2 + $0xa8] sm:$0xff]
    %v47 = vld [vmem:[#allocation2 + $0xb0] sm:$0xff]
    %v48 = vld [vmem:[#allocation2 + $0xb8] sm:$0xff]
    %v49 = vld [vmem:[#allocation2 + $0xc0] sm:$0xff]
    %v50 = vld [vmem:[#allocation2 + $0xc8] sm:$0xff]
    %v51 = vld [vmem:[#allocation2 + $0xd0] sm:$0xff]
    %v52 = vld [vmem:[#allocation2 + $0xd8] sm:$0xff]
    %v53 = vld [vmem:[#allocation2 + $0xe0] sm:$0xff]
    %v54 = vld [vmem:[#allocation2 + $0xe8] sm:$0xff]
    %v55 = vld [vmem:[#allocation2 + $0xf0] sm:$0xff]
    %v56 = vld [vmem:[#allocation2 + $0xf8] sm:$0xff]
    %v57 = vld [vmem:[#allocation2 + $0x100] sm:$0xff]
    %v58 = vld [vmem:[#allocation2 + $0x108] sm:$0xff]
    %v59 = vld [vmem:[#allocation2 + $0x110] sm:$0xff]
    %v60 = vld [vmem:[#allocation2 + $0x118] sm:$0xff]
    %v61 = vld [vmem:[#allocation2 + $0x120] sm:$0xff]
    %v62 = vld [vmem:[#allocation2 + $0x128] sm:$0xff]
    %v63 = vld [vmem:[#allocation2 + $0x130] sm:$0xff]
    %v64 = vld [vmem:[#allocation2 + $0x138] sm:$0xff]
    %v65 = vld [vmem:[#allocation2 + $0x140] sm:$0xff]
    %v66 = vld [vmem:[#allocation2 + $0x148] sm:$0xff]
    %v67 = vld [vmem:[#allocation2 + $0x150] sm:$0xff]
    %v68 = vld [vmem:[#allocation2 + $0x158] sm:$0xff]
    %v69 = vld [vmem:[#allocation2 + $0x160] sm:$0xff]
    %v70 = vld [vmem:[#allocation2 + $0x168] sm:$0xff]
    %v71 = vld [vmem:[#allocation2 + $0x170] sm:$0xff]
    %v72 = vld [vmem:[#allocation2 + $0x178] sm:$0xff]
    %v73 = vld [vmem:[#allocation2 + $0x180] sm:$0xff]
    %v74 = vld [vmem:[#allocation2 + $0x188] sm:$0xff]
    %v75 = vld [vmem:[#allocation2 + $0x190] sm:$0xff]
    %v76 = vld [vmem:[#allocation2 + $0x198] sm:$0xff]
    %v77 = vld [vmem:[#allocation2 + $0x1a0] sm:$0xff]
    %v78 = vld [vmem:[#allocation2 + $0x1a8] sm:$0xff]
    %v79 = vld [vmem:[#allocation2 + $0x1b0] sm:$0xff]
    %v80 = vld [vmem:[#allocation2 + $0x1b8] sm:$0xff]
    %v81 = vld [vmem:[#allocation2 + $0x1c0] sm:$0xff]
    %v82 = vld [vmem:[#allocation2 + $0x1c8] sm:$0xff]
    %v83 = vld [vmem:[#allocation2 + $0x1d0] sm:$0xff]
    %v84 = vld [vmem:[#allocation2 + $0x1d8] sm:$0xff]
    %v85 = vld [vmem:[#allocation2 + $0x1e0] sm:$0xff]
    %v86 = vld [vmem:[#allocation2 + $0x1e8] sm:$0xff]
    %v87 = vld [vmem:[#allocation2 + $0x1f0] sm:$0xff]
    %v88 = vld [vmem:[#allocation2 + $0x1f8] sm:$0xff]
    %v89 = vld [vmem:[#allocation2 + $0x200] sm:$0xff]
    %v90 = vld [vmem:[#allocation2 + $0x208] sm:$0xff]
    %v91 = vld [vmem:[#allocation2 + $0x210] sm:$0xff]
    %v92 = vld [vmem:[#allocation2 + $0x218] sm:$0xff]
    %v93 = vld [vmem:[#allocation2 + $0x220] sm:$0xff]
    %v94 = vld [vmem:[#allocation2 + $0x228] sm:$0xff]
    %v95 = vld [vmem:[#allocation2 + $0x230] sm:$0xff]
    %v96 = vld [vmem:[#allocation2 + $0x238] sm:$0xff]
    %v97 = vld [vmem:[#allocation2 + $0x240] sm:$0xff]
    %v98 = vld [vmem:[#allocation2 + $0x248] sm:$0xff]
    %v99 = vld [vmem:[#allocation2 + $0x250] sm:$0xff]
    %v100 = vld [vmem:[#allocation2 + $0x258] sm:$0xff]
    %v101 = vld [vmem:[#allocation2 + $0x260] sm:$0xff]
    %v102 = vld [vmem:[#allocation2 + $0x268] sm:$0xff]
    %v103 = vld [vmem:[#allocation2 + $0x270] sm:$0xff]
    %v104 = vld [vmem:[#allocation2 + $0x278] sm:$0xff]
    %v105 = vld [vmem:[#allocation2 + $0x280] sm:$0xff]
    %v106 = vld [vmem:[#allocation2 + $0x288] sm:$0xff]
    %v107 = vld [vmem:[#allocation2 + $0x290] sm:$0xff]
    %v108 = vld [vmem:[#allocation2 + $0x298] sm:$0xff]
    %v109 = vld [vmem:[#allocation2 + $0x2a0] sm:$0xff]
    %v110 = vld [vmem:[#allocation2 + $0x2a8] sm:$0xff]
    %v111 = vld [vmem:[#allocation2 + $0x2b0] sm:$0xff]
    %v112 = vld [vmem:[#allocation2 + $0x2b8] sm:$0xff]
    %v113 = vld [vmem:[#allocation2 + $0x2c0] sm:$0xff]
    %v114 = vld [vmem:[#allocation2 + $0x2c8] sm:$0xff]
    %v115 = vld [vmem:[#allocation2 + $0x2d0] sm:$0xff]
    %v116 = vld [vmem:[#allocation2 + $0x2d8] sm:$0xff]
    %v117 = vld [vmem:[#allocation2 + $0x2e0] sm:$0xff]
    %v118 = vld [vmem:[#allocation2 + $0x2e8] sm:$0xff]
    %v119 = vld [vmem:[#allocation2 + $0x2f0] sm:$0xff]
    %v120 = vld [vmem:[#allocation2 + $0x2f8] sm:$0xff]
    %v121 = vld [vmem:[#allocation2 + $0x300] sm:$0xff]
    %v122 = vld [vmem:[#allocation2 + $0x308] sm:$0xff]
    %v123 = vld [vmem:[#allocation2 + $0x310] sm:$0xff]
    %v124 = vld [vmem:[#allocation2 + $0x318] sm:$0xff]
    %v125 = vld [vmem:[#allocation2 + $0x320] sm:$0xff]
    %v126 = vld [vmem:[#allocation2 + $0x328] sm:$0xff]
    %v127 = vld [vmem:[#allocation2 + $0x330] sm:$0xff]
    %v128 = vld [vmem:[#allocation2 + $0x338] sm:$0xff]
    %v129 = vld [vmem:[#allocation2 + $0x340] sm:$0xff]
    %v130 = vld [vmem:[#allocation2 + $0x348] sm:$0xff]
    %v131 = vld [vmem:[#allocation2 + $0x350] sm:$0xff]
    %v132 = vld [vmem:[#allocation2 + $0x358] sm:$0xff]
    %v133 = vld [vmem:[#allocation2 + $0x360] sm:$0xff]
    %v134 = vld [vmem:[#allocation2 + $0x368] sm:$0xff]
    %v135 = vld [vmem:[#allocation2 + $0x370] sm:$0xff]
    %v136 = vld [vmem:[#allocation2 + $0x378] sm:$0xff]
    %v137 = vld [vmem:[#allocation2 + $0x380] sm:$0xff]
    %v138 = vld [vmem:[#allocation2 + $0x388] sm:$0xff]
    %v139 = vld [vmem:[#allocation2 + $0x390] sm:$0xff]
    %v140 = vld [vmem:[#allocation2 + $0x398] sm:$0xff]
    %v141 = vld [vmem:[#allocation2 + $0x3a0] sm:$0xff]
    %v142 = vld [vmem:[#allocation2 + $0x3a8] sm:$0xff]
    %v143 = vld [vmem:[#allocation2 + $0x3b0] sm:$0xff]
    %v144 = vld [vmem:[#allocation2 + $0x3b8] sm:$0xff]
    %v145 = vld [vmem:[#allocation2 + $0x3c0] sm:$0xff]
    %v146 = vld [vmem:[#allocation2 + $0x3c8] sm:$0xff]
    %v147 = vld [vmem:[#allocation2 + $0x3d0] sm:$0xff]
    %v148 = vld [vmem:[#allocation2 + $0x3d8] sm:$0xff]
    %v149 = vld [vmem:[#allocation2 + $0x3e0] sm:$0xff]
    %v150 = vld [vmem:[#allocation2 + $0x3e8] sm:$0xff]
    %v151 = vld [vmem:[#allocation2 + $0x3f0] sm:$0xff]
    %v152 = vld [vmem:[#allocation2 + $0x3f8] sm:$0xff]
    %v153 = vmax.f32 %v25, -1.0
    %v154 = vmax.f32 %v26, -1.0
    %v155 = vmax.f32 %v27, -1.0
    %v156 = vmax.f32 %v28, -1.0
    %v157 = vmax.f32 %v29, -1.0
    %v158 = vmax.f32 %v30, -1.0
    %v159 = vmax.f32 %v31, -1.0
    %v160 = vmax.f32 %v32, -1.0
    %v161 = vmax.f32 %v33, -1.0
    %v162 = vmax.f32 %v34, -1.0
    %v163 = vmax.f32 %v35, -1.0
    %v164 = vmax.f32 %v36, -1.0
    %v165 = vmax.f32 %v37, -1.0
    %v166 = vmax.f32 %v38, -1.0
    %v167 = vmax.f32 %v39, -1.0
    %v168 = vmax.f32 %v40, -1.0
    %v169 = vmax.f32 %v41, -1.0
    %v170 = vmax.f32 %v42, -1.0
    %v171 = vmax.f32 %v43, -1.0
    %v172 = vmax.f32 %v44, -1.0
    %v173 = vmax.f32 %v45, -1.0
    %v174 = vmax.f32 %v46, -1.0
    %v175 = vmax.f32 %v47, -1.0
    %v176 = vmax.f32 %v48, -1.0
    %v177 = vmax.f32 %v49, -1.0
    %v178 = vmax.f32 %v50, -1.0
    %v179 = vmax.f32 %v51, -1.0
    %v180 = vmax.f32 %v52, -1.0
    %v181 = vmax.f32 %v53, -1.0
    %v182 = vmax.f32 %v54, -1.0
    %v183 = vmax.f32 %v55, -1.0
    %v184 = vmax.f32 %v56, -1.0
    %v185 = vmax.f32 %v57, -1.0
    %v186 = vmax.f32 %v58, -1.0
    %v187 = vmax.f32 %v59, -1.0
    %v188 = vmax.f32 %v60, -1.0
    %v189 = vmax.f32 %v61, -1.0
    %v190 = vmax.f32 %v62, -1.0
    %v191 = vmax.f32 %v63, -1.0
    %v192 = vmax.f32 %v64, -1.0
    %v193 = vmax.f32 %v65, -1.0
    %v194 = vmax.f32 %v66, -1.0
    %v195 = vmax.f32 %v67, -1.0
    %v196 = vmax.f32 %v68, -1.0
    %v197 = vmax.f32 %v69, -1.0
    %v198 = vmax.f32 %v70, -1.0
    %v199 = vmax.f32 %v71, -1.0
    %v200 = vmax.f32 %v72, -1.0
    %v201 = vmax.f32 %v73, -1.0
    %v202 = vmax.f32 %v74, -1.0
    %v203 = vmax.f32 %v75, -1.0
    %v204 = vmax.f32 %v76, -1.0
    %v205 = vmax.f32 %v77, -1.0
    %v206 = vmax.f32 %v78, -1.0
    %v207 = vmax.f32 %v79, -1.0
    %v208 = vmax.f32 %v80, -1.0
    %v209 = vmax.f32 %v81, -1.0
    %v210 = vmax.f32 %v82, -1.0
    %v211 = vmax.f32 %v83, -1.0
    %v212 = vmax.f32 %v84, -1.0
    %v213 = vmax.f32 %v85, -1.0
    %v214 = vmax.f32 %v86, -1.0
    %v215 = vmax.f32 %v87, -1.0
    %v216 = vmax.f32 %v88, -1.0
    %v217 = vmax.f32 %v89, -1.0
    %v218 = vmax.f32 %v90, -1.0
    %v219 = vmax.f32 %v91, -1.0
    %v220 = vmax.f32 %v92, -1.0
    %v221 = vmax.f32 %v93, -1.0
    %v222 = vmax.f32 %v94, -1.0
    %v223 = vmax.f32 %v95, -1.0
    %v224 = vmax.f32 %v96, -1.0
    %v225 = vmax.f32 %v97, -1.0
    %v226 = vmax.f32 %v98, -1.0
    %v227 = vmax.f32 %v99, -1.0
    %v228 = vmax.f32 %v100, -1.0
    %v229 = vmax.f32 %v101, -1.0
    %v230 = vmax.f32 %v102, -1.0
    %v231 = vmax.f32 %v103, -1.0
    %v232 = vmax.f32 %v104, -1.0
    %v233 = vmax.f32 %v105, -1.0
    %v234 = vmax.f32 %v106, -1.0
    %v235 = vmax.f32 %v107, -1.0
    %v236 = vmax.f32 %v108, -1.0
    %v237 = vmax.f32 %v109, -1.0
    %v238 = vmax.f32 %v110, -1.0
    %v239 = vmax.f32 %v111, -1.0
    %v240 = vmax.f32 %v112, -1.0
    %v241 = vmax.f32 %v113, -1.0
    %v242 = vmax.f32 %v114, -1.0
    %v243 = vmax.f32 %v115, -1.0
    %v244 = vmax.f32 %v116, -1.0
    %v245 = vmax.f32 %v117, -1.0
    %v246 = vmax.f32 %v118, -1.0
    %v247 = vmax.f32 %v119, -1.0
    %v248 = vmax.f32 %v120, -1.0
    %v249 = vmax.f32 %v121, -1.0
    %v250 = vmax.f32 %v122, -1.0
    %v251 = vmax.f32 %v123, -1.0
    %v252 = vmax.f32 %v124, -1.0
    %v253 = vmax.f32 %v125, -1.0
    %v254 = vmax.f32 %v126, -1.0
    %v255 = vmax.f32 %v127, -1.0
    %v256 = vmax.f32 %v128, -1.0
    %v257 = vmax.f32 %v129, -1.0
    %v258 = vmax.f32 %v130, -1.0
    %v259 = vmax.f32 %v131, -1.0
    %v260 = vmax.f32 %v132, -1.0
    %v261 = vmax.f32 %v133, -1.0
    %v262 = vmax.f32 %v134, -1.0
    %v263 = vmax.f32 %v135, -1.0
    %v264 = vmax.f32 %v136, -1.0
    %v265 = vmax.f32 %v137, -1.0
    %v266 = vmax.f32 %v138, -1.0
    %v267 = vmax.f32 %v139, -1.0
    %v268 = vmax.f32 %v140, -1.0
    %v269 = vmax.f32 %v141, -1.0
    %v270 = vmax.f32 %v142, -1.0
    %v271 = vmax.f32 %v143, -1.0
    %v272 = vmax.f32 %v144, -1.0
    %v273 = vmax.f32 %v145, -1.0
    %v274 = vmax.f32 %v146, -1.0
    %v275 = vmax.f32 %v147, -1.0
    %v276 = vmax.f32 %v148, -1.0
    %v277 = vmax.f32 %v149, -1.0
    %v278 = vmax.f32 %v150, -1.0
    %v279 = vmax.f32 %v151, -1.0
    %v280 = vmax.f32 %v152, -1.0
    %v281 = vmin.f32 %v153, 1.0
    %v282 = vmin.f32 %v154, 1.0
    %v283 = vmin.f32 %v155, 1.0
    %v284 = vmin.f32 %v156, 1.0
    %v285 = vmin.f32 %v157, 1.0
    %v286 = vmin.f32 %v158, 1.0
    %v287 = vmin.f32 %v159, 1.0
    %v288 = vmin.f32 %v160, 1.0
    %v289 = vmin.f32 %v161, 1.0
    %v290 = vmin.f32 %v162, 1.0
    %v291 = vmin.f32 %v163, 1.0
    %v292 = vmin.f32 %v164, 1.0
    %v293 = vmin.f32 %v165, 1.0
    %v294 = vmin.f32 %v166, 1.0
    %v295 = vmin.f32 %v167, 1.0
    %v296 = vmin.f32 %v168, 1.0
    %v297 = vmin.f32 %v169, 1.0
    %v298 = vmin.f32 %v170, 1.0
    %v299 = vmin.f32 %v171, 1.0
    %v300 = vmin.f32 %v172, 1.0
    %v301 = vmin.f32 %v173, 1.0
    %v302 = vmin.f32 %v174, 1.0
    %v303 = vmin.f32 %v175, 1.0
    %v304 = vmin.f32 %v176, 1.0
    %v305 = vmin.f32 %v177, 1.0
    %v306 = vmin.f32 %v178, 1.0
    %v307 = vmin.f32 %v179, 1.0
    %v308 = vmin.f32 %v180, 1.0
    %v309 = vmin.f32 %v181, 1.0
    %v310 = vmin.f32 %v182, 1.0
    %v311 = vmin.f32 %v183, 1.0
    %v312 = vmin.f32 %v184, 1.0
    %v313 = vmin.f32 %v185, 1.0
    %v314 = vmin.f32 %v186, 1.0
    %v315 = vmin.f32 %v187, 1.0
    %v316 = vmin.f32 %v188, 1.0
    %v317 = vmin.f32 %v189, 1.0
    %v318 = vmin.f32 %v190, 1.0
    %v319 = vmin.f32 %v191, 1.0
    %v320 = vmin.f32 %v192, 1.0
    %v321 = vmin.f32 %v193, 1.0
    %v322 = vmin.f32 %v194, 1.0
    %v323 = vmin.f32 %v195, 1.0
    %v324 = vmin.f32 %v196, 1.0
    %v325 = vmin.f32 %v197, 1.0
    %v326 = vmin.f32 %v198, 1.0
    %v327 = vmin.f32 %v199, 1.0
    %v328 = vmin.f32 %v200, 1.0
    %v329 = vmin.f32 %v201, 1.0
    %v330 = vmin.f32 %v202, 1.0
    %v331 = vmin.f32 %v203, 1.0
    %v332 = vmin.f32 %v204, 1.0
    %v333 = vmin.f32 %v205, 1.0
    %v334 = vmin.f32 %v206, 1.0
    %v335 = vmin.f32 %v207, 1.0
    %v336 = vmin.f32 %v208, 1.0
    %v337 = vmin.f32 %v209, 1.0
    %v338 = vmin.f32 %v210, 1.0
    %v339 = vmin.f32 %v211, 1.0
    %v340 = vmin.f32 %v212, 1.0
    %v341 = vmin.f32 %v213, 1.0
    %v342 = vmin.f32 %v214, 1.0
    %v343 = vmin.f32 %v215, 1.0
    %v344 = vmin.f32 %v216, 1.0
    %v345 = vmin.f32 %v217, 1.0
    %v346 = vmin.f32 %v218, 1.0
    %v347 = vmin.f32 %v219, 1.0
    %v348 = vmin.f32 %v220, 1.0
    %v349 = vmin.f32 %v221, 1.0
    %v350 = vmin.f32 %v222, 1.0
    %v351 = vmin.f32 %v223, 1.0
    %v352 = vmin.f32 %v224, 1.0
    %v353 = vmin.f32 %v225, 1.0
    %v354 = vmin.f32 %v226, 1.0
    %v355 = vmin.f32 %v227, 1.0
    %v356 = vmin.f32 %v228, 1.0
    %v357 = vmin.f32 %v229, 1.0
    %v358 = vmin.f32 %v230, 1.0
    %v359 = vmin.f32 %v231, 1.0
    %v360 = vmin.f32 %v232, 1.0
    %v361 = vmin.f32 %v233, 1.0
    %v362 = vmin.f32 %v234, 1.0
    %v363 = vmin.f32 %v235, 1.0
    %v364 = vmin.f32 %v236, 1.0
    %v365 = vmin.f32 %v237, 1.0
    %v366 = vmin.f32 %v238, 1.0
    %v367 = vmin.f32 %v239, 1.0
    %v368 = vmin.f32 %v240, 1.0
    %v369 = vmin.f32 %v241, 1.0
    %v370 = vmin.f32 %v242, 1.0
    %v371 = vmin.f32 %v243, 1.0
    %v372 = vmin.f32 %v244, 1.0
    %v373 = vmin.f32 %v245, 1.0
    %v374 = vmin.f32 %v246, 1.0
    %v375 = vmin.f32 %v247, 1.0
    %v376 = vmin.f32 %v248, 1.0
    %v377 = vmin.f32 %v249, 1.0
    %v378 = vmin.f32 %v250, 1.0
    %v379 = vmin.f32 %v251, 1.0
    %v380 = vmin.f32 %v252, 1.0
    %v381 = vmin.f32 %v253, 1.0
    %v382 = vmin.f32 %v254, 1.0
    %v383 = vmin.f32 %v255, 1.0
    %v384 = vmin.f32 %v256, 1.0
    %v385 = vmin.f32 %v257, 1.0
    %v386 = vmin.f32 %v258, 1.0
    %v387 = vmin.f32 %v259, 1.0
    %v388 = vmin.f32 %v260, 1.0
    %v389 = vmin.f32 %v261, 1.0
    %v390 = vmin.f32 %v262, 1.0
    %v391 = vmin.f32 %v263, 1.0
    %v392 = vmin.f32 %v264, 1.0
    %v393 = vmin.f32 %v265, 1.0
    %v394 = vmin.f32 %v266, 1.0
    %v395 = vmin.f32 %v267, 1.0
    %v396 = vmin.f32 %v268, 1.0
    %v397 = vmin.f32 %v269, 1.0
    %v398 = vmin.f32 %v270, 1.0
    %v399 = vmin.f32 %v271, 1.0
    %v400 = vmin.f32 %v272, 1.0
    %v401 = vmin.f32 %v273, 1.0
    %v402 = vmin.f32 %v274, 1.0
    %v403 = vmin.f32 %v275, 1.0
    %v404 = vmin.f32 %v276, 1.0
    %v405 = vmin.f32 %v277, 1.0
    %v406 = vmin.f32 %v278, 1.0
    %v407 = vmin.f32 %v279, 1.0
    %v408 = vmin.f32 %v280, 1.0
    %409 = vst [vmem:[#allocation5] sm:$0xff] %v281
    %410 = vst [vmem:[#allocation5 + $0x8] sm:$0xff] %v282
    %411 = vst [vmem:[#allocation5 + $0x10] sm:$0xff] %v283
    %412 = vst [vmem:[#allocation5 + $0x18] sm:$0xff] %v284
    %413 = vst [vmem:[#allocation5 + $0x20] sm:$0xff] %v285
    %414 = vst [vmem:[#allocation5 + $0x28] sm:$0xff] %v286
    %415 = vst [vmem:[#allocation5 + $0x30] sm:$0xff] %v287
    %416 = vst [vmem:[#allocation5 + $0x38] sm:$0xff] %v288
    %417 = vst [vmem:[#allocation5 + $0x40] sm:$0xff] %v289
    %418 = vst [vmem:[#allocation5 + $0x48] sm:$0xff] %v290
    %419 = vst [vmem:[#allocation5 + $0x50] sm:$0xff] %v291
    %420 = vst [vmem:[#allocation5 + $0x58] sm:$0xff] %v292
    %421 = vst [vmem:[#allocation5 + $0x60] sm:$0xff] %v293
    %422 = vst [vmem:[#allocation5 + $0x68] sm:$0xff] %v294
    %423 = vst [vmem:[#allocation5 + $0x70] sm:$0xff] %v295
    %424 = vst [vmem:[#allocation5 + $0x78] sm:$0xff] %v296
    %425 = vst [vmem:[#allocation5 + $0x80] sm:$0xff] %v297
    %426 = vst [vmem:[#allocation5 + $0x88] sm:$0xff] %v298
    %427 = vst [vmem:[#allocation5 + $0x90] sm:$0xff] %v299
    %428 = vst [vmem:[#allocation5 + $0x98] sm:$0xff] %v300
    %429 = vst [vmem:[#allocation5 + $0xa0] sm:$0xff] %v301
    %430 = vst [vmem:[#allocation5 + $0xa8] sm:$0xff] %v302
    %431 = vst [vmem:[#allocation5 + $0xb0] sm:$0xff] %v303
    %432 = vst [vmem:[#allocation5 + $0xb8] sm:$0xff] %v304
    %433 = vst [vmem:[#allocation5 + $0xc0] sm:$0xff] %v305
    %434 = vst [vmem:[#allocation5 + $0xc8] sm:$0xff] %v306
    %435 = vst [vmem:[#allocation5 + $0xd0] sm:$0xff] %v307
    %436 = vst [vmem:[#allocation5 + $0xd8] sm:$0xff] %v308
    %437 = vst [vmem:[#allocation5 + $0xe0] sm:$0xff] %v309
    %438 = vst [vmem:[#allocation5 + $0xe8] sm:$0xff] %v310
    %439 = vst [vmem:[#allocation5 + $0xf0] sm:$0xff] %v311
    %440 = vst [vmem:[#allocation5 + $0xf8] sm:$0xff] %v312
    %441 = vst [vmem:[#allocation5 + $0x100] sm:$0xff] %v313
    %442 = vst [vmem:[#allocation5 + $0x108] sm:$0xff] %v314
    %443 = vst [vmem:[#allocation5 + $0x110] sm:$0xff] %v315
    %444 = vst [vmem:[#allocation5 + $0x118] sm:$0xff] %v316
    %445 = vst [vmem:[#allocation5 + $0x120] sm:$0xff] %v317
    %446 = vst [vmem:[#allocation5 + $0x128] sm:$0xff] %v318
    %447 = vst [vmem:[#allocation5 + $0x130] sm:$0xff] %v319
    %448 = vst [vmem:[#allocation5 + $0x138] sm:$0xff] %v320
    %449 = vst [vmem:[#allocation5 + $0x140] sm:$0xff] %v321
    %450 = vst [vmem:[#allocation5 + $0x148] sm:$0xff] %v322
    %451 = vst [vmem:[#allocation5 + $0x150] sm:$0xff] %v323
    %452 = vst [vmem:[#allocation5 + $0x158] sm:$0xff] %v324
    %453 = vst [vmem:[#allocation5 + $0x160] sm:$0xff] %v325
    %454 = vst [vmem:[#allocation5 + $0x168] sm:$0xff] %v326
    %455 = vst [vmem:[#allocation5 + $0x170] sm:$0xff] %v327
    %456 = vst [vmem:[#allocation5 + $0x178] sm:$0xff] %v328
    %457 = vst [vmem:[#allocation5 + $0x180] sm:$0xff] %v329
    %458 = vst [vmem:[#allocation5 + $0x188] sm:$0xff] %v330
    %459 = vst [vmem:[#allocation5 + $0x190] sm:$0xff] %v331
    %460 = vst [vmem:[#allocation5 + $0x198] sm:$0xff] %v332
    %461 = vst [vmem:[#allocation5 + $0x1a0] sm:$0xff] %v333
    %462 = vst [vmem:[#allocation5 + $0x1a8] sm:$0xff] %v334
    %463 = vst [vmem:[#allocation5 + $0x1b0] sm:$0xff] %v335
    %464 = vst [vmem:[#allocation5 + $0x1b8] sm:$0xff] %v336
    %465 = vst [vmem:[#allocation5 + $0x1c0] sm:$0xff] %v337
    %466 = vst [vmem:[#allocation5 + $0x1c8] sm:$0xff] %v338
    %467 = vst [vmem:[#allocation5 + $0x1d0] sm:$0xff] %v339
    %468 = vst [vmem:[#allocation5 + $0x1d8] sm:$0xff] %v340
    %469 = vst [vmem:[#allocation5 + $0x1e0] sm:$0xff] %v341
    %470 = vst [vmem:[#allocation5 + $0x1e8] sm:$0xff] %v342
    %471 = vst [vmem:[#allocation5 + $0x1f0] sm:$0xff] %v343
    %472 = vst [vmem:[#allocation5 + $0x1f8] sm:$0xff] %v344
    %473 = vst [vmem:[#allocation5 + $0x200] sm:$0xff] %v345
    %474 = vst [vmem:[#allocation5 + $0x208] sm:$0xff] %v346
    %475 = vst [vmem:[#allocation5 + $0x210] sm:$0xff] %v347
    %476 = vst [vmem:[#allocation5 + $0x218] sm:$0xff] %v348
    %477 = vst [vmem:[#allocation5 + $0x220] sm:$0xff] %v349
    %478 = vst [vmem:[#allocation5 + $0x228] sm:$0xff] %v350
    %479 = vst [vmem:[#allocation5 + $0x230] sm:$0xff] %v351
    %480 = vst [vmem:[#allocation5 + $0x238] sm:$0xff] %v352
    %481 = vst [vmem:[#allocation5 + $0x240] sm:$0xff] %v353
    %482 = vst [vmem:[#allocation5 + $0x248] sm:$0xff] %v354
    %483 = vst [vmem:[#allocation5 + $0x250] sm:$0xff] %v355
    %484 = vst [vmem:[#allocation5 + $0x258] sm:$0xff] %v356
    %485 = vst [vmem:[#allocation5 + $0x260] sm:$0xff] %v357
    %486 = vst [vmem:[#allocation5 + $0x268] sm:$0xff] %v358
    %487 = vst [vmem:[#allocation5 + $0x270] sm:$0xff] %v359
    %488 = vst [vmem:[#allocation5 + $0x278] sm:$0xff] %v360
    %489 = vst [vmem:[#allocation5 + $0x280] sm:$0xff] %v361
    %490 = vst [vmem:[#allocation5 + $0x288] sm:$0xff] %v362
    %491 = vst [vmem:[#allocation5 + $0x290] sm:$0xff] %v363
    %492 = vst [vmem:[#allocation5 + $0x298] sm:$0xff] %v364
    %493 = vst [vmem:[#allocation5 + $0x2a0] sm:$0xff] %v365
    %494 = vst [vmem:[#allocation5 + $0x2a8] sm:$0xff] %v366
    %495 = vst [vmem:[#allocation5 + $0x2b0] sm:$0xff] %v367
    %496 = vst [vmem:[#allocation5 + $0x2b8] sm:$0xff] %v368
    %497 = vst [vmem:[#allocation5 + $0x2c0] sm:$0xff] %v369
    %498 = vst [vmem:[#allocation5 + $0x2c8] sm:$0xff] %v370
    %499 = vst [vmem:[#allocation5 + $0x2d0] sm:$0xff] %v371
    %500 = vst [vmem:[#allocation5 + $0x2d8] sm:$0xff] %v372
    %501 = vst [vmem:[#allocation5 + $0x2e0] sm:$0xff] %v373
    %502 = vst [vmem:[#allocation5 + $0x2e8] sm:$0xff] %v374
    %503 = vst [vmem:[#allocation5 + $0x2f0] sm:$0xff] %v375
    %504 = vst [vmem:[#allocation5 + $0x2f8] sm:$0xff] %v376
    %505 = vst [vmem:[#allocation5 + $0x300] sm:$0xff] %v377
    %506 = vst [vmem:[#allocation5 + $0x308] sm:$0xff] %v378
    %507 = vst [vmem:[#allocation5 + $0x310] sm:$0xff] %v379
    %508 = vst [vmem:[#allocation5 + $0x318] sm:$0xff] %v380
    %509 = vst [vmem:[#allocation5 + $0x320] sm:$0xff] %v381
    %510 = vst [vmem:[#allocation5 + $0x328] sm:$0xff] %v382
    %511 = vst [vmem:[#allocation5 + $0x330] sm:$0xff] %v383
    %512 = vst [vmem:[#allocation5 + $0x338] sm:$0xff] %v384
    %513 = vst [vmem:[#allocation5 + $0x340] sm:$0xff] %v385
    %514 = vst [vmem:[#allocation5 + $0x348] sm:$0xff] %v386
    %515 = vst [vmem:[#allocation5 + $0x350] sm:$0xff] %v387
    %516 = vst [vmem:[#allocation5 + $0x358] sm:$0xff] %v388
    %517 = vst [vmem:[#allocation5 + $0x360] sm:$0xff] %v389
    %518 = vst [vmem:[#allocation5 + $0x368] sm:$0xff] %v390
    %519 = vst [vmem:[#allocation5 + $0x370] sm:$0xff] %v391
    %520 = vst [vmem:[#allocation5 + $0x378] sm:$0xff] %v392
    %521 = vst [vmem:[#allocation5 + $0x380] sm:$0xff] %v393
    %522 = vst [vmem:[#allocation5 + $0x388] sm:$0xff] %v394
    %523 = vst [vmem:[#allocation5 + $0x390] sm:$0xff] %v395
    %524 = vst [vmem:[#allocation5 + $0x398] sm:$0xff] %v396
    %525 = vst [vmem:[#allocation5 + $0x3a0] sm:$0xff] %v397
    %526 = vst [vmem:[#allocation5 + $0x3a8] sm:$0xff] %v398
    %527 = vst [vmem:[#allocation5 + $0x3b0] sm:$0xff] %v399
    %528 = vst [vmem:[#allocation5 + $0x3b8] sm:$0xff] %v400
    %529 = vst [vmem:[#allocation5 + $0x3c0] sm:$0xff] %v401
    %530 = vst [vmem:[#allocation5 + $0x3c8] sm:$0xff] %v402
    %531 = vst [vmem:[#allocation5 + $0x3d0] sm:$0xff] %v403
    %532 = vst [vmem:[#allocation5 + $0x3d8] sm:$0xff] %v404
    %533 = vst [vmem:[#allocation5 + $0x3e0] sm:$0xff] %v405
    %534 = vst [vmem:[#allocation5 + $0x3e8] sm:$0xff] %v406
    %535 = vst [vmem:[#allocation5 + $0x3f0] sm:$0xff] %v407
    %536 = vst [vmem:[#allocation5 + $0x3f8] sm:$0xff] %v408
    // Predicated region
    $region10: #{tpu_custom_call.1} parent=1 // pred_check
      _
    $region11: #{tpu_custom_call.1} parent=1 // pred_check_branch
      %538 = sbr.rel (0) target = $region13
    $region12: #{tpu_custom_call.1} parent=1 // pred_region
      %540 = vsyncadd [#allocation4], 0
      %s541 = sshll.u32 [#allocation5], 4
      %s542 = int_to_ptr.vmem [resolvable:$true] %s541
      %s543 = sshll.u32 %s1, 4
      %s544 = int_to_ptr.hbm [resolvable:$true] %s543
      %549 = dma.vmem_to_hbm [thread:$0]  %s542, 16384, %s544, [#allocation4], 128, 128, 8
    $region13: #{tpu_custom_call.1} parent=1 // pred_fallthru
      _
    // Predicated region
    $region14: #{tpu_custom_call.1} parent=1 // pred_check
      _
    $region15: #{tpu_custom_call.1} parent=1 // pred_check_branch
      %551 = sbr.rel (0) target = $region17
    $region16: #{tpu_custom_call.1} parent=1 // pred_region
      %553 = dma.done [#allocation4], 16384
    $region17: #{tpu_custom_call.1} parent=1 // pred_fallthru
      _
    %554 = vsyncpa [#allocation3], 1
    %555 = vsyncpa [#allocation4], 1

</llo_original>
